<compile_context>
chip_gen: v7x
topology: tpu7x:2x2x1
jax: 0.10.0
libtpu: 0.0.40
codegen_flags: <defaults>
</compile_context>

<pallas_src>
import jax
import jax.numpy as jnp
from jax.experimental import pallas as pl
from jax.experimental.pallas import tpu as pltpu

EPS = 1e-5
NEG_SLOPE = 0.1


def _layernorm(h, gamma, beta):
    # f32 LayerNorm (population variance), matches torch.nn.LayerNorm defaults.
    mu = jnp.mean(h, axis=-1, keepdims=True)
    var = jnp.mean((h - mu) ** 2, axis=-1, keepdims=True)
    return (h - mu) * jax.lax.rsqrt(var + EPS) * gamma + beta


def _leaky_relu(h):
    return jnp.where(h > 0, h, NEG_SLOPE * h)


def jdi_kernel(x_ref, w1_ref, g1_ref, b1_ref, w2_ref, g2_ref, b2_ref,
               w3_ref, b3_ref, o_ref):
    # x arrives as f32 (single HBM read); cast to bf16 on the VPU for the MXU,
    # accumulate every matmul in f32 (preferred_element_type).
    x = x_ref[...].astype(jnp.bfloat16)

    # input_layer (no bias) -> LayerNorm(128) -> LeakyReLU(0.1)   [f32 elementwise]
    h = jnp.dot(x, w1_ref[...], preferred_element_type=jnp.float32)
    h = _leaky_relu(_layernorm(h, g1_ref[...], b1_ref[...]))

    # hidden1 (no bias) -> LayerNorm(32) -> LeakyReLU(0.1)
    h = jnp.dot(h.astype(jnp.bfloat16), w2_ref[...], preferred_element_type=jnp.float32)
    h = _leaky_relu(_layernorm(h, g2_ref[...], b2_ref[...]))

    # hidden2 (with bias, bias kept in f32); stored unpadded (out_features wide).
    out = jnp.dot(h.astype(jnp.bfloat16), w3_ref[...],
                  preferred_element_type=jnp.float32) + b3_ref[...]
    o_ref[...] = out.astype(o_ref.dtype)


def _cdiv(a, b):
    return -(-a // b)


def _round_up(x, m):
    return _cdiv(x, m) * m


def _num_tensorcores_per_chip():
    # v7x exposes 2 TensorCores per chip; v5e/v6e have 1. Best-effort query; default 1.
    try:
        kind = jax.devices()[0].device_kind.lower()
        if "v7" in kind:
            return 2
    except Exception:
        pass
    return 1


def jdi_forward(x, params, *, tm=1024, out_dtype=jnp.bfloat16):
    """x: (B, in_features) float32. params: f32 weights, (in, out) layout for x @ W."""
    B, in_features = x.shape
    hid1 = params["w1"].shape[1]          # 128
    hid2 = params["w2"].shape[1]          # 32
    out_features = params["w3"].shape[1]

    # ---- tiling: pick step count first, then balance the tile across the steps ----
    tm = max(int(tm), 16)
    steps = _cdiv(B, tm)
    if _num_tensorcores_per_chip() >= 2:
        if steps == 1 and B >= 32:
            steps = 2                      # give both v7x TensorCores work
        elif steps > 1 and steps % 2 == 1:
            steps += 1                     # even step count balances both cores
    tm_eff = max(16, _round_up(_cdiv(B, steps), 16))   # mult of 16: bf16 packs 2 rows/sublane
    Bp = steps * tm_eff

    xp = x if Bp == B else jnp.pad(x, ((0, Bp - B), (0, 0)))   # zero rows -> LN stays finite

    # Only the (tiny, grid-invariant) weight matrices are pre-cast to bf16; x stays f32.
    w1 = params["w1"].astype(jnp.bfloat16)
    w2 = params["w2"].astype(jnp.bfloat16)
    w3 = params["w3"].astype(jnp.bfloat16)
    # LayerNorm affine params and the final bias stay f32.

    full = lambda shape: pl.BlockSpec(shape, lambda i: (0, 0))

    out = pl.pallas_call(
        jdi_kernel,
        out_shape=jax.ShapeDtypeStruct((Bp, out_features), out_dtype),
        grid_spec=pl.GridSpec(
            grid=(steps,),
            in_specs=[
                # x row tile is the only streamed input (f32, cast in-kernel).
                pl.BlockSpec((tm_eff, in_features), lambda i: (i, 0)),
                full((in_features, hid1)),       # w1 (bf16, VMEM-resident across grid)
                full((1, hid1)),                 # ln1 gamma (f32)
                full((1, hid1)),                 # ln1 beta  (f32)
                full((hid1, hid2)),              # w2 (bf16)
                full((1, hid2)),                 # ln2 gamma (f32)
                full((1, hid2)),                 # ln2 beta  (f32)
                full((hid2, out_features)),      # w3 (bf16, unpadded)
                full((1, out_features)),         # b3 (f32)
            ],
            # Last dim equals the full array dim -> legal block; no 8x lane-pad inflation.
            out_specs=pl.BlockSpec((tm_eff, out_features), lambda i: (i, 0)),
        ),
        compiler_params=pltpu.CompilerParams(
            dimension_semantics=("parallel",)),
    )(xp, w1, params["g1"], params["b1"], w2, params["g2"], params["b2"], w3, params["b3"])

    return out if Bp == B else out[:B]


def init_params(key, in_features, out_features):
    """Deterministic synthetic weights (kaiming-ish scaling), shapes match JDIModel."""
    k1, k2, k3, k4 = jax.random.split(key, 4)
    # PyTorch Linear stores (out, in); we store the transpose (in, out) for x @ W.
    w1 = jax.random.normal(k1, (in_features, 128), jnp.float32) / jnp.sqrt(in_features)
    w2 = jax.random.normal(k2, (128, 32), jnp.float32) / jnp.sqrt(128.0)
    w3 = jax.random.normal(k3, (32, out_features), jnp.float32) / jnp.sqrt(32.0)
    b3 = jax.random.normal(k4, (1, out_features), jnp.float32) * 0.01
    # LayerNorm affine params: default init weight=1, bias=0.
    g1 = jnp.ones((1, 128), jnp.float32)
    b1 = jnp.zeros((1, 128), jnp.float32)
    g2 = jnp.ones((1, 32), jnp.float32)
    b2 = jnp.zeros((1, 32), jnp.float32)
    return dict(w1=w1, g1=g1, b1=b1, w2=w2, g2=g2, b2=b2, w3=w3, b3=b3)


def jdi_reference_f32(x, p):
    h = x @ p["w1"]
    h = _leaky_relu(_layernorm(h, p["g1"], p["b1"]))
    h = h @ p["w2"]
    h = _leaky_relu(_layernorm(h, p["g2"], p["b2"]))
    return h @ p["w3"] + p["b3"]


def jdi_reference_bf16(x, p):
    """Same bf16-operand / f32-accumulate recipe as the kernel (tight-tolerance check)."""
    h = jnp.dot(x.astype(jnp.bfloat16), p["w1"].astype(jnp.bfloat16),
                preferred_element_type=jnp.float32)
    h = _leaky_relu(_layernorm(h, p["g1"], p["b1"]))
    h = jnp.dot(h.astype(jnp.bfloat16), p["w2"].astype(jnp.bfloat16),
                preferred_element_type=jnp.float32)
    h = _leaky_relu(_layernorm(h, p["g2"], p["b2"]))
    return jnp.dot(h.astype(jnp.bfloat16), p["w3"].astype(jnp.bfloat16),
                   preferred_element_type=jnp.float32) + p["b3"]


if __name__ == "__main__":
    key = jax.random.PRNGKey(0)
    kx, kp = jax.random.split(key)

    in_features, out_features, batch = 64, 16, 16
    x = jax.random.normal(kx, (batch, in_features), jnp.float32)
    params = init_params(kp, in_features, out_features)

    out = jdi_forward(x, params)                 # bf16 output by default
    out = jax.block_until_ready(out)
    assert out.shape == (batch, out_features)
    out_f32 = out.astype(jnp.float32)

    # Check vs. a reference that uses the same bf16-operand / f32-accumulate recipe
    # (tolerance covers the final bf16 store rounding).
    ref_bf16 = jdi_reference_bf16(x, params)
    assert jnp.allclose(out_f32, ref_bf16, atol=3e-2, rtol=3e-2), "mismatch vs bf16 reference"

    # Loose sanity check vs. the full-f32 reference (bf16 operand + output tolerance).
    ref_f32 = jdi_reference_f32(x, params)
    assert jnp.allclose(out_f32, ref_f32, atol=8e-2, rtol=8e-2), "mismatch vs f32 reference"

    print("KERNEL_OK")
</pallas_src>

<mosaic_0001>
module attributes {stable_mosaic.version = 11 : i64} {
  func.func @jdi_kernel(%arg0: i32, %arg1: memref<16x64xf32, #tpu.memory_space<vmem>>, %arg2: memref<64x128xbf16, #tpu.memory_space<vmem>>, %arg3: memref<1x128xf32, #tpu.memory_space<vmem>>, %arg4: memref<1x128xf32, #tpu.memory_space<vmem>>, %arg5: memref<128x32xbf16, #tpu.memory_space<vmem>>, %arg6: memref<1x32xf32, #tpu.memory_space<vmem>>, %arg7: memref<1x32xf32, #tpu.memory_space<vmem>>, %arg8: memref<32x16xbf16, #tpu.memory_space<vmem>>, %arg9: memref<1x16xf32, #tpu.memory_space<vmem>>, %arg10: memref<16x16xbf16, #tpu.memory_space<vmem>>) attributes {dimension_semantics = [#tpu.dimension_semantics<parallel>], iteration_bounds = array<i64: 1>, scalar_prefetch = 0 : i64, scratch_operands = 0 : i64, tpu.core_type = #tpu.core_type<tc>, window_params = [{transform_indices = @transform_0, window_bounds = array<i64: 16, 64>}, {pipeline_mode = #tpu.pipeline_mode<synchronous>, transform_indices = @transform_1, window_bounds = array<i64: 64, 128>}, {pipeline_mode = #tpu.pipeline_mode<synchronous>, transform_indices = @transform_2, window_bounds = array<i64: 1, 128>}, {pipeline_mode = #tpu.pipeline_mode<synchronous>, transform_indices = @transform_3, window_bounds = array<i64: 1, 128>}, {pipeline_mode = #tpu.pipeline_mode<synchronous>, transform_indices = @transform_4, window_bounds = array<i64: 128, 32>}, {pipeline_mode = #tpu.pipeline_mode<synchronous>, transform_indices = @transform_5, window_bounds = array<i64: 1, 32>}, {pipeline_mode = #tpu.pipeline_mode<synchronous>, transform_indices = @transform_6, window_bounds = array<i64: 1, 32>}, {pipeline_mode = #tpu.pipeline_mode<synchronous>, transform_indices = @transform_7, window_bounds = array<i64: 32, 16>}, {pipeline_mode = #tpu.pipeline_mode<synchronous>, transform_indices = @transform_8, window_bounds = array<i64: 1, 16>}, {transform_indices = @transform_9, window_bounds = array<i64: 16, 16>}]} {
    %c0 = arith.constant 0 : index
    %c0_0 = arith.constant 0 : index
    %0 = vector.load %arg1[%c0, %c0_0] : memref<16x64xf32, #tpu.memory_space<vmem>>, vector<16x64xf32>
    %1 = arith.truncf %0 : vector<16x64xf32> to vector<16x64xbf16>
    %c0_1 = arith.constant 0 : index
    %c0_2 = arith.constant 0 : index
    %2 = vector.load %arg2[%c0_1, %c0_2] : memref<64x128xbf16, #tpu.memory_space<vmem>>, vector<64x128xbf16>
    %cst = arith.constant dense<0.000000e+00> : vector<16x128xf32>
    %3 = tpu.matmul %1, %2, %cst {dimension_numbers = #tpu.dot_dimension_numbers<[1], [0], [0], [1], [0, 0, 1, 1], [], []>} : vector<16x64xbf16>, vector<64x128xbf16>, vector<16x128xf32> -> vector<16x128xf32>
    %c0_3 = arith.constant 0 : index
    %c0_4 = arith.constant 0 : index
    %4 = vector.load %arg3[%c0_3, %c0_4] : memref<1x128xf32, #tpu.memory_space<vmem>>, vector<1x128xf32>
    %c0_5 = arith.constant 0 : index
    %c0_6 = arith.constant 0 : index
    %5 = vector.load %arg4[%c0_5, %c0_6] : memref<1x128xf32, #tpu.memory_space<vmem>>, vector<1x128xf32>
    %cst_7 = arith.constant dense<0.000000e+00> : vector<16xf32>
    %6 = vector.multi_reduction <add>, %3, %cst_7 [1] : vector<16x128xf32> to vector<16xf32>
    %7 = vector.shape_cast %6 : vector<16xf32> to vector<16x1xf32>
    %cst_8 = arith.constant 1.280000e+02 : f32
    %8 = vector.broadcast %cst_8 : f32 to vector<16x1xf32>
    %9 = arith.divf %7, %8 : vector<16x1xf32>
    %10 = vector.broadcast %9 : vector<16x1xf32> to vector<16x128xf32>
    %11 = arith.subf %3, %10 : vector<16x128xf32>
    %12 = arith.mulf %11, %11 : vector<16x128xf32>
    %cst_9 = arith.constant dense<0.000000e+00> : vector<16xf32>
    %13 = vector.multi_reduction <add>, %12, %cst_9 [1] : vector<16x128xf32> to vector<16xf32>
    %14 = vector.shape_cast %13 : vector<16xf32> to vector<16x1xf32>
    %cst_10 = arith.constant 1.280000e+02 : f32
    %15 = vector.broadcast %cst_10 : f32 to vector<16x1xf32>
    %16 = arith.divf %14, %15 : vector<16x1xf32>
    %17 = vector.broadcast %9 : vector<16x1xf32> to vector<16x128xf32>
    %18 = arith.subf %3, %17 : vector<16x128xf32>
    %cst_11 = arith.constant 9.99999974E-6 : f32
    %19 = vector.broadcast %cst_11 : f32 to vector<16x1xf32>
    %20 = arith.addf %16, %19 : vector<16x1xf32>
    %21 = math.rsqrt %20 : vector<16x1xf32>
    %22 = vector.broadcast %21 : vector<16x1xf32> to vector<16x128xf32>
    %23 = arith.mulf %18, %22 : vector<16x128xf32>
    %24 = vector.broadcast %4 : vector<1x128xf32> to vector<16x128xf32>
    %25 = arith.mulf %23, %24 : vector<16x128xf32>
    %26 = vector.broadcast %5 : vector<1x128xf32> to vector<16x128xf32>
    %27 = arith.addf %25, %26 : vector<16x128xf32>
    %cst_12 = arith.constant 0.000000e+00 : f32
    %28 = vector.broadcast %cst_12 : f32 to vector<16x128xf32>
    %29 = arith.cmpf ogt, %27, %28 : vector<16x128xf32>
    %cst_13 = arith.constant 1.000000e-01 : f32
    %30 = vector.broadcast %cst_13 : f32 to vector<16x128xf32>
    %31 = arith.mulf %30, %27 : vector<16x128xf32>
    %32 = arith.select %29, %27, %31 : vector<16x128xi1>, vector<16x128xf32>
    %33 = arith.truncf %32 : vector<16x128xf32> to vector<16x128xbf16>
    %c0_14 = arith.constant 0 : index
    %c0_15 = arith.constant 0 : index
    %34 = vector.load %arg5[%c0_14, %c0_15] : memref<128x32xbf16, #tpu.memory_space<vmem>>, vector<128x32xbf16>
    %cst_16 = arith.constant dense<0.000000e+00> : vector<16x32xf32>
    %35 = tpu.matmul %33, %34, %cst_16 {dimension_numbers = #tpu.dot_dimension_numbers<[1], [0], [0], [1], [0, 0, 1, 1], [], []>} : vector<16x128xbf16>, vector<128x32xbf16>, vector<16x32xf32> -> vector<16x32xf32>
    %c0_17 = arith.constant 0 : index
    %c0_18 = arith.constant 0 : index
    %36 = vector.load %arg6[%c0_17, %c0_18] : memref<1x32xf32, #tpu.memory_space<vmem>>, vector<1x32xf32>
    %c0_19 = arith.constant 0 : index
    %c0_20 = arith.constant 0 : index
    %37 = vector.load %arg7[%c0_19, %c0_20] : memref<1x32xf32, #tpu.memory_space<vmem>>, vector<1x32xf32>
    %cst_21 = arith.constant dense<0.000000e+00> : vector<16xf32>
    %38 = vector.multi_reduction <add>, %35, %cst_21 [1] : vector<16x32xf32> to vector<16xf32>
    %39 = vector.shape_cast %38 : vector<16xf32> to vector<16x1xf32>
    %cst_22 = arith.constant 3.200000e+01 : f32
    %40 = vector.broadcast %cst_22 : f32 to vector<16x1xf32>
    %41 = arith.divf %39, %40 : vector<16x1xf32>
    %42 = vector.broadcast %41 : vector<16x1xf32> to vector<16x32xf32>
    %43 = arith.subf %35, %42 : vector<16x32xf32>
    %44 = arith.mulf %43, %43 : vector<16x32xf32>
    %cst_23 = arith.constant dense<0.000000e+00> : vector<16xf32>
    %45 = vector.multi_reduction <add>, %44, %cst_23 [1] : vector<16x32xf32> to vector<16xf32>
    %46 = vector.shape_cast %45 : vector<16xf32> to vector<16x1xf32>
    %cst_24 = arith.constant 3.200000e+01 : f32
    %47 = vector.broadcast %cst_24 : f32 to vector<16x1xf32>
    %48 = arith.divf %46, %47 : vector<16x1xf32>
    %49 = vector.broadcast %41 : vector<16x1xf32> to vector<16x32xf32>
    %50 = arith.subf %35, %49 : vector<16x32xf32>
    %cst_25 = arith.constant 9.99999974E-6 : f32
    %51 = vector.broadcast %cst_25 : f32 to vector<16x1xf32>
    %52 = arith.addf %48, %51 : vector<16x1xf32>
    %53 = math.rsqrt %52 : vector<16x1xf32>
    %54 = vector.broadcast %53 : vector<16x1xf32> to vector<16x32xf32>
    %55 = arith.mulf %50, %54 : vector<16x32xf32>
    %56 = vector.broadcast %36 : vector<1x32xf32> to vector<16x32xf32>
    %57 = arith.mulf %55, %56 : vector<16x32xf32>
    %58 = vector.broadcast %37 : vector<1x32xf32> to vector<16x32xf32>
    %59 = arith.addf %57, %58 : vector<16x32xf32>
    %cst_26 = arith.constant 0.000000e+00 : f32
    %60 = vector.broadcast %cst_26 : f32 to vector<16x32xf32>
    %61 = arith.cmpf ogt, %59, %60 : vector<16x32xf32>
    %cst_27 = arith.constant 1.000000e-01 : f32
    %62 = vector.broadcast %cst_27 : f32 to vector<16x32xf32>
    %63 = arith.mulf %62, %59 : vector<16x32xf32>
    %64 = arith.select %61, %59, %63 : vector<16x32xi1>, vector<16x32xf32>
    %65 = arith.truncf %64 : vector<16x32xf32> to vector<16x32xbf16>
    %c0_28 = arith.constant 0 : index
    %c0_29 = arith.constant 0 : index
    %66 = vector.load %arg8[%c0_28, %c0_29] : memref<32x16xbf16, #tpu.memory_space<vmem>>, vector<32x16xbf16>
    %cst_30 = arith.constant dense<0.000000e+00> : vector<16x16xf32>
    %67 = tpu.matmul %65, %66, %cst_30 {dimension_numbers = #tpu.dot_dimension_numbers<[1], [0], [0], [1], [0, 0, 1, 1], [], []>} : vector<16x32xbf16>, vector<32x16xbf16>, vector<16x16xf32> -> vector<16x16xf32>
    %c0_31 = arith.constant 0 : index
    %c0_32 = arith.constant 0 : index
    %68 = vector.load %arg9[%c0_31, %c0_32] : memref<1x16xf32, #tpu.memory_space<vmem>>, vector<1x16xf32>
    %69 = vector.broadcast %68 : vector<1x16xf32> to vector<16x16xf32>
    %70 = arith.addf %67, %69 : vector<16x16xf32>
    %71 = arith.truncf %70 : vector<16x16xf32> to vector<16x16xbf16>
    %c0_33 = arith.constant 0 : index
    %c0_34 = arith.constant 0 : index
    %72 = vector.load %arg10[%c0_33, %c0_34] : memref<16x16xbf16, #tpu.memory_space<vmem>>, vector<16x16xbf16>
    tpu.vector_store %arg10[%c0_33, %c0_34], %71 {strides = array<i32>} : memref<16x16xbf16, #tpu.memory_space<vmem>>, vector<16x16xbf16>,
    return
  }
  func.func @transform_0(%arg0: i32) -> (i32, i32) {
    %c0_i32 = arith.constant 0 : i32
    %c0_i32_0 = arith.constant 0 : i32
    return %arg0, %c0_i32 : i32, i32
  }
  func.func @transform_1(%arg0: i32) -> (i32, i32) {
    %c0_i32 = arith.constant 0 : i32
    %c0_i32_0 = arith.constant 0 : i32
    %c0_i32_1 = arith.constant 0 : i32
    return %c0_i32, %c0_i32_0 : i32, i32
  }
  func.func @transform_2(%arg0: i32) -> (i32, i32) {
    %c0_i32 = arith.constant 0 : i32
    %c0_i32_0 = arith.constant 0 : i32
    %c0_i32_1 = arith.constant 0 : i32
    return %c0_i32, %c0_i32_0 : i32, i32
  }
  func.func @transform_3(%arg0: i32) -> (i32, i32) {
    %c0_i32 = arith.constant 0 : i32
    %c0_i32_0 = arith.constant 0 : i32
    %c0_i32_1 = arith.constant 0 : i32
    return %c0_i32, %c0_i32_0 : i32, i32
  }
  func.func @transform_4(%arg0: i32) -> (i32, i32) {
    %c0_i32 = arith.constant 0 : i32
    %c0_i32_0 = arith.constant 0 : i32
    %c0_i32_1 = arith.constant 0 : i32
    return %c0_i32, %c0_i32_0 : i32, i32
  }
  func.func @transform_5(%arg0: i32) -> (i32, i32) {
    %c0_i32 = arith.constant 0 : i32
    %c0_i32_0 = arith.constant 0 : i32
    %c0_i32_1 = arith.constant 0 : i32
    return %c0_i32, %c0_i32_0 : i32, i32
  }
  func.func @transform_6(%arg0: i32) -> (i32, i32) {
    %c0_i32 = arith.constant 0 : i32
    %c0_i32_0 = arith.constant 0 : i32
    %c0_i32_1 = arith.constant 0 : i32
    return %c0_i32, %c0_i32_0 : i32, i32
  }
  func.func @transform_7(%arg0: i32) -> (i32, i32) {
    %c0_i32 = arith.constant 0 : i32
    %c0_i32_0 = arith.constant 0 : i32
    %c0_i32_1 = arith.constant 0 : i32
    return %c0_i32, %c0_i32_0 : i32, i32
  }
  func.func @transform_8(%arg0: i32) -> (i32, i32) {
    %c0_i32 = arith.constant 0 : i32
    %c0_i32_0 = arith.constant 0 : i32
    %c0_i32_1 = arith.constant 0 : i32
    return %c0_i32, %c0_i32_0 : i32, i32
  }
  func.func @transform_9(%arg0: i32) -> (i32, i32) {
    %c0_i32 = arith.constant 0 : i32
    %c0_i32_0 = arith.constant 0 : i32
    return %arg0, %c0_i32 : i32, i32
  }
}

</mosaic_0001>

<llo_original>
// kernel: tpu_custom_call.1
$region0: #{tpu_custom_call.1}
  #allocation0 [shape = 'u32[]', space=smem, size = 0x4, offset = 0x4, fixed_abs, tag = 'smem constant byte address 0x4 - core index']
  #allocation1 [shape = 'u32[144,128]{1,0:T(1,128)}', space=vmem, size = 0x12000, scoped, tag = 'internal scratch']
  %s0 = inlined_call_operand.vmem [shape: f32[16,64], index: 0, kind: input, shape index: {}]
  %s1 = inlined_call_operand.vmem [shape: bf16[64,128], index: 1, kind: input, shape index: {}]
  %s2 = inlined_call_operand.vmem [shape: f32[1,128], index: 2, kind: input, shape index: {}]
  %s3 = inlined_call_operand.vmem [shape: f32[1,128], index: 3, kind: input, shape index: {}]
  %s4 = inlined_call_operand.vmem [shape: bf16[128,32], index: 4, kind: input, shape index: {}]
  %s5 = inlined_call_operand.vmem [shape: f32[1,32], index: 5, kind: input, shape index: {}]
  %s6 = inlined_call_operand.vmem [shape: f32[1,32], index: 6, kind: input, shape index: {}]
  %s7 = inlined_call_operand.vmem [shape: bf16[32,16], index: 7, kind: input, shape index: {}]
  %s8 = inlined_call_operand.vmem [shape: f32[1,16], index: 8, kind: input, shape index: {}]
  %s9 = inlined_call_operand.hbm [shape: bf16[16,16], index: 9, kind: output, shape index: {}]
  %s10 = sld [smem:[#allocation0]]
  $region46: #{tpu_custom_call.1} parent=0
    _
  %s12 = ssub.s32 1, %s10
  %s13 = scalar_select 0, %s12, %s10
  $region1: #{tpu_custom_call.1} parent=0
    #allocation2 [shape = 'u8[4096]{0}', space=vmem, size = 0x1000, scoped, tag = 'output window, operand 0, single buffered']
    #allocation3 [shape = 's32[1]{0}', space=sflag, size = 0x4, scoped, tag = 'scoped memory for tpu_custom_call.1']
    %14 = vsyncpa [#allocation3], 0
    // Predicated region
    $region2: #{tpu_custom_call.1} parent=1 // pred_check
      _
    $region3: #{tpu_custom_call.1} parent=1 // pred_check_branch
      %16 = sbr.rel (0) target = $region5
    $region4: #{tpu_custom_call.1} parent=1 // pred_region
      _
    $region5: #{tpu_custom_call.1} parent=1 // pred_fallthru
      _
    // Predicated region
    $region6: #{tpu_custom_call.1} parent=1 // pred_check
      _
    $region7: #{tpu_custom_call.1} parent=1 // pred_check_branch
      %18 = sbr.rel (0) target = $region9
    $region8: #{tpu_custom_call.1} parent=1 // pred_region
      _
    $region9: #{tpu_custom_call.1} parent=1 // pred_fallthru
      _
    // Predicated region
    $region10: #{tpu_custom_call.1} parent=1 // pred_check
      _
    $region11: #{tpu_custom_call.1} parent=1 // pred_check_branch
      %20 = sbr.rel (0) target = $region13
    $region12: #{tpu_custom_call.1} parent=1 // pred_region
      _
    $region13: #{tpu_custom_call.1} parent=1 // pred_fallthru
      _
    // Predicated region
    $region14: #{tpu_custom_call.1} parent=1 // pred_check
      _
    $region15: #{tpu_custom_call.1} parent=1 // pred_check_branch
      %22 = sbr.rel (0) target = $region17
    $region16: #{tpu_custom_call.1} parent=1 // pred_region
      _
    $region17: #{tpu_custom_call.1} parent=1 // pred_fallthru
      _
    // Predicated region
    $region18: #{tpu_custom_call.1} parent=1 // pred_check
      _
    $region19: #{tpu_custom_call.1} parent=1 // pred_check_branch
      %24 = sbr.rel (0) target = $region21
    $region20: #{tpu_custom_call.1} parent=1 // pred_region
      _
    $region21: #{tpu_custom_call.1} parent=1 // pred_fallthru
      _
    // Predicated region
    $region22: #{tpu_custom_call.1} parent=1 // pred_check
      _
    $region23: #{tpu_custom_call.1} parent=1 // pred_check_branch
      %26 = sbr.rel (0) target = $region25
    $region24: #{tpu_custom_call.1} parent=1 // pred_region
      _
    $region25: #{tpu_custom_call.1} parent=1 // pred_fallthru
      _
    // Predicated region
    $region26: #{tpu_custom_call.1} parent=1 // pred_check
      _
    $region27: #{tpu_custom_call.1} parent=1 // pred_check_branch
      %28 = sbr.rel (0) target = $region29
    $region28: #{tpu_custom_call.1} parent=1 // pred_region
      _
    $region29: #{tpu_custom_call.1} parent=1 // pred_fallthru
      _
    // Predicated region
    $region30: #{tpu_custom_call.1} parent=1 // pred_check
      _
    $region31: #{tpu_custom_call.1} parent=1 // pred_check_branch
      %30 = sbr.rel (0) target = $region33
    $region32: #{tpu_custom_call.1} parent=1 // pred_region
      _
    $region33: #{tpu_custom_call.1} parent=1 // pred_fallthru
      _
    // Predicated region
    $region34: #{tpu_custom_call.1} parent=1 // pred_check
      _
    $region35: #{tpu_custom_call.1} parent=1 // pred_check_branch
      %32 = sbr.rel (0) target = $region37
    $region36: #{tpu_custom_call.1} parent=1 // pred_region
      _
    $region37: #{tpu_custom_call.1} parent=1 // pred_fallthru
      _
    %v34 = vld [vmem:[%s0] sm:$0xff]
    %v35 = vld [vmem:[%s0 + $0x8] sm:$0xff]
    %v36 = vpack.c.bf16 %v35, %v34
    %v37 = vld [vmem:[%s1] sm:$0xf]
    %v38 = vld [vmem:[%s1 + $0x4] sm:$0xf]
    %v39 = vld [vmem:[%s1 + $0x8] sm:$0xf]
    %v40 = vld [vmem:[%s1 + $0xc] sm:$0xf]
    %v41 = vld [vmem:[%s1 + $0x10] sm:$0xf]
    %v42 = vld [vmem:[%s1 + $0x14] sm:$0xf]
    %v43 = vld [vmem:[%s1 + $0x18] sm:$0xf]
    %v44 = vld [vmem:[%s1 + $0x1c] sm:$0xf]
    %v53 = vunpack.c.l.b16 %v37
    %v54 = vunpack.c.l.b16 %v38
    %v55 = vunpack.c.l.b16 %v39
    %v56 = vunpack.c.l.b16 %v40
    %v57 = vunpack.c.l.b16 %v41
    %v58 = vunpack.c.l.b16 %v42
    %v59 = vunpack.c.l.b16 %v43
    %v60 = vunpack.c.l.b16 %v44
    %v61 = vpack.c.b16 %v54, %v53
    %v62 = vpack.c.b16 %v56, %v55
    %v63 = vpack.c.b16 %v58, %v57
    %v64 = vpack.c.b16 %v60, %v59
    %vm69 = vcmask 523264
    %v71 = vsel %vm69, %v36, 0
    %73 = vmatprep.subr.bf16.mxu0 0
    %74 = vmatpush1.bf16.msra.mxu0 %v61
    %75 = vmatprep.subr.bf16.mxu0 0
    %76 = vmatpush1.bf16.msra.mxu0 %v62
    %77 = vmatprep.subr.bf16.mxu0 0
    %78 = vmatpush1.bf16.msra.mxu0 %v63
    %79 = vmatprep.subr.bf16.mxu0 0
    %80 = vmatpush1.bf16.msra.mxu0 %v64
    %81 = vmatprep.subr.bf16.mxu0 0
    %82 = vmatpush1.bf16.msra.mxu0 0
    %83 = vmatprep.subr.bf16.mxu0 0
    %84 = vmatpush1.bf16.msra.mxu0 0
    %85 = vmatprep.subr.bf16.mxu0 0
    %86 = vmatpush1.bf16.msra.mxu0 0
    %87 = vmatprep.subr.bf16.mxu0 0
    %88 = vmatpush1.bf16.msra.mxu0 0
    %89 = vmatprep.subr.bf16.mxu0 0
    %90 = vmatpush1.bf16.msra.mxu0 0
    %91 = vmatprep.subr.bf16.mxu0 0
    %92 = vmatpush1.bf16.msra.mxu0 0
    %93 = vmatprep.subr.bf16.mxu0 0
    %94 = vmatpush1.bf16.msra.mxu0 0
    %95 = vmatprep.subr.bf16.mxu0 0
    %96 = vmatpush1.bf16.msra.mxu0 0
    %97 = vmatprep.subr.bf16.mxu0 0
    %98 = vmatpush1.bf16.msra.mxu0 0
    %99 = vmatprep.subr.bf16.mxu0 0
    %100 = vmatpush1.bf16.msra.mxu0 0
    %101 = vmatprep.subr.bf16.mxu0 0
    %102 = vmatpush1.bf16.msra.mxu0 0
    %103 = vmatprep.subr.bf16.mxu0 0
    %104 = vmatpush1.bf16.msra.mxu0 0
    %105 = vmatprep.mubr.bf16.mxu0 0
    %106 = vmatmul.mubr.bf16.gmra.mrb[0].mxu0 %v71
    %v107 = vpop.f32.mrb[0].mxu0
    %v108 = vadd.f32 0.0, %v107
    %v109 = vpop.f32.mrb[0].mxu0
    %v110 = vpop.f32.mrb[0].mxu0
    %v111 = vadd.f32 0.0, %v110
    %v112 = vpop.f32.mrb[0].mxu0
    %113 = vdwg.mxu0
    %v114 = vld [vmem:[%s2] sm:$0x1]
    %v115 = vld [vmem:[%s3] sm:$0x1]
    %116 = vadd.xlane.f32.xlu0 %v108
    %v117 = vpop.xlane.xlu0 %116
    %118 = vadd.xlane.f32.xlu0 %v111
    %v119 = vpop.xlane.xlu0 %118
    %v120 = vrcp.pop 128.0
    %v121 = vmul.f32 %v117, %v120
    %v122 = vmul.f32 %v119, %v120
    %v123 = vsub.f32 %v108, %v121
    %v124 = vsub.f32 %v111, %v122
    %v125 = vmul.f32 %v123, %v123
    %v126 = vmul.f32 %v124, %v124
    %127 = vadd.xlane.f32.xlu0 %v125
    %v128 = vpop.xlane.xlu0 %127
    %129 = vadd.xlane.f32.xlu0 %v126
    %v130 = vpop.xlane.xlu0 %129
    %v131 = vmul.f32 %v128, %v120
    %v132 = vmul.f32 %v130, %v120
    %v133 = vadd.f32 %v131, 1e-05
    %v134 = vadd.f32 %v132, 1e-05
    %v135 = vrsqrt.pop %v133
    %v136 = vrsqrt.pop %v134
    %v137 = vmul.f32 %v123, %v135
    %v138 = vmul.f32 %v124, %v136
    %v140 = vlaneseq
    %v141 = vshrl.u32 %v140, 7
    %v142 = vsub.s32 0, %v141
    %v143 = vrot.slane %v114, %v142
    %v145 = vmul.f32 %v137, %v143
    %v146 = vmul.f32 %v138, %v143
    %v148 = vlaneseq
    %v149 = vshrl.u32 %v148, 7
    %v150 = vsub.s32 0, %v149
    %v151 = vrot.slane %v115, %v150
    %v153 = vadd.f32 %v145, %v151
    %v154 = vadd.f32 %v146, %v151
    %vm155 = vcmp.gt.f32.partialorder %v153, 0.0
    %vm156 = vcmp.gt.f32.partialorder %v154, 0.0
    %v157 = vmul.f32 %v153, 0.1
    %v158 = vmul.f32 %v154, 0.1
    %v159 = vsel %vm155, %v153, %v157
    %v160 = vsel %vm156, %v154, %v158
    %v161 = vpack.c.bf16 %v160, %v159
    %v162 = vld [vmem:[%s4] sm:$0xf]
    %v163 = vld [vmem:[%s4 + $0x4] sm:$0xf]
    %v164 = vld [vmem:[%s4 + $0x8] sm:$0xf]
    %v165 = vld [vmem:[%s4 + $0xc] sm:$0xf]
    %v166 = vld [vmem:[%s4 + $0x10] sm:$0xf]
    %v167 = vld [vmem:[%s4 + $0x14] sm:$0xf]
    %v168 = vld [vmem:[%s4 + $0x18] sm:$0xf]
    %v169 = vld [vmem:[%s4 + $0x1c] sm:$0xf]
    %v170 = vld [vmem:[%s4 + $0x20] sm:$0xf]
    %v171 = vld [vmem:[%s4 + $0x24] sm:$0xf]
    %v172 = vld [vmem:[%s4 + $0x28] sm:$0xf]
    %v173 = vld [vmem:[%s4 + $0x2c] sm:$0xf]
    %v174 = vld [vmem:[%s4 + $0x30] sm:$0xf]
    %v175 = vld [vmem:[%s4 + $0x34] sm:$0xf]
    %v176 = vld [vmem:[%s4 + $0x38] sm:$0xf]
    %v177 = vld [vmem:[%s4 + $0x3c] sm:$0xf]
    %v194 = vunpack.c.l.b16 %v162
    %v195 = vunpack.c.l.b16 %v163
    %v196 = vunpack.c.l.b16 %v164
    %v197 = vunpack.c.l.b16 %v165
    %v198 = vunpack.c.l.b16 %v166
    %v199 = vunpack.c.l.b16 %v167
    %v200 = vunpack.c.l.b16 %v168
    %v201 = vunpack.c.l.b16 %v169
    %v202 = vunpack.c.l.b16 %v170
    %v203 = vunpack.c.l.b16 %v171
    %v204 = vunpack.c.l.b16 %v172
    %v205 = vunpack.c.l.b16 %v173
    %v206 = vunpack.c.l.b16 %v174
    %v207 = vunpack.c.l.b16 %v175
    %v208 = vunpack.c.l.b16 %v176
    %v209 = vunpack.c.l.b16 %v177
    %v210 = vpack.c.b16 %v195, %v194
    %v211 = vpack.c.b16 %v197, %v196
    %v212 = vpack.c.b16 %v199, %v198
    %v213 = vpack.c.b16 %v201, %v200
    %v214 = vpack.c.b16 %v203, %v202
    %v215 = vpack.c.b16 %v205, %v204
    %v216 = vpack.c.b16 %v207, %v206
    %v217 = vpack.c.b16 %v209, %v208
    %226 = vmatprep.subr.bf16.mxu0 0
    %227 = vmatpush1.bf16.msra.mxu0 %v210
    %228 = vmatprep.subr.bf16.mxu0 0
    %229 = vmatpush1.bf16.msra.mxu0 %v211
    %230 = vmatprep.subr.bf16.mxu0 0
    %231 = vmatpush1.bf16.msra.mxu0 %v212
    %232 = vmatprep.subr.bf16.mxu0 0
    %233 = vmatpush1.bf16.msra.mxu0 %v213
    %234 = vmatprep.subr.bf16.mxu0 0
    %235 = vmatpush1.bf16.msra.mxu0 %v214
    %236 = vmatprep.subr.bf16.mxu0 0
    %237 = vmatpush1.bf16.msra.mxu0 %v215
    %238 = vmatprep.subr.bf16.mxu0 0
    %239 = vmatpush1.bf16.msra.mxu0 %v216
    %240 = vmatprep.subr.bf16.mxu0 0
    %241 = vmatpush1.bf16.msra.mxu0 %v217
    %242 = vmatprep.subr.bf16.mxu0 0
    %243 = vmatpush1.bf16.msra.mxu0 0
    %244 = vmatprep.subr.bf16.mxu0 0
    %245 = vmatpush1.bf16.msra.mxu0 0
    %246 = vmatprep.subr.bf16.mxu0 0
    %247 = vmatpush1.bf16.msra.mxu0 0
    %248 = vmatprep.subr.bf16.mxu0 0
    %249 = vmatpush1.bf16.msra.mxu0 0
    %250 = vmatprep.subr.bf16.mxu0 0
    %251 = vmatpush1.bf16.msra.mxu0 0
    %252 = vmatprep.subr.bf16.mxu0 0
    %253 = vmatpush1.bf16.msra.mxu0 0
    %254 = vmatprep.subr.bf16.mxu0 0
    %255 = vmatpush1.bf16.msra.mxu0 0
    %256 = vmatprep.subr.bf16.mxu0 0
    %257 = vmatpush1.bf16.msra.mxu0 0
    %258 = vmatprep.mubr.bf16.mxu0 0
    %259 = vmatmul.mubr.bf16.gmra.mrb[0].mxu0 %v161
    %v260 = vpop.f32.mrb[0].mxu0
    %v261 = vadd.f32 0.0, %v260
    %v262 = vpop.f32.mrb[0].mxu0
    %v263 = vpop.f32.mrb[0].mxu0
    %v264 = vadd.f32 0.0, %v263
    %v265 = vpop.f32.mrb[0].mxu0
    %266 = vdwg.mxu0
    %v267 = vld [vmem:[%s5] sm:$0x1]
    %v268 = vld [vmem:[%s6] sm:$0x1]
    %vm269 = vcmask 261120
    %v270 = vsel %vm269, %v261, 0.0
    %271 = vadd.xlane.f32.xlu0 %v270
    %v272 = vpop.xlane.xlu0 %271
    %v273 = vsel %vm269, %v264, 0.0
    %274 = vadd.xlane.f32.xlu0 %v273
    %v275 = vpop.xlane.xlu0 %274
    %v276 = vrcp.pop 32.0
    %v277 = vmul.f32 %v272, %v276
    %v278 = vmul.f32 %v275, %v276
    %v279 = vsub.f32 %v261, %v277
    %v280 = vsub.f32 %v264, %v278
    %v281 = vmul.f32 %v279, %v279
    %v282 = vmul.f32 %v280, %v280
    %v283 = vsel %vm269, %v281, 0.0
    %284 = vadd.xlane.f32.xlu0 %v283
    %v285 = vpop.xlane.xlu0 %284
    %v286 = vsel %vm269, %v282, 0.0
    %287 = vadd.xlane.f32.xlu0 %v286
    %v288 = vpop.xlane.xlu0 %287
    %v289 = vmul.f32 %v285, %v276
    %v290 = vmul.f32 %v288, %v276
    %v291 = vadd.f32 %v289, 1e-05
    %v292 = vadd.f32 %v290, 1e-05
    %v293 = vrsqrt.pop %v291
    %v294 = vrsqrt.pop %v292
    %v295 = vmul.f32 %v279, %v293
    %v296 = vmul.f32 %v280, %v294
    %v298 = vlaneseq
    %v299 = vshrl.u32 %v298, 7
    %v300 = vsub.s32 0, %v299
    %v301 = vrot.slane %v267, %v300
    %v303 = vmul.f32 %v295, %v301
    %v304 = vmul.f32 %v296, %v301
    %v306 = vlaneseq
    %v307 = vshrl.u32 %v306, 7
    %v308 = vsub.s32 0, %v307
    %v309 = vrot.slane %v268, %v308
    %v311 = vadd.f32 %v303, %v309
    %v312 = vadd.f32 %v304, %v309
    %vm313 = vcmp.gt.f32.partialorder %v311, 0.0
    %vm314 = vcmp.gt.f32.partialorder %v312, 0.0
    %v315 = vmul.f32 %v311, 0.1
    %v316 = vmul.f32 %v312, 0.1
    %v317 = vsel %vm313, %v311, %v315
    %v318 = vsel %vm314, %v312, %v316
    %v319 = vpack.c.bf16 %v318, %v317
    %v320 = vld [vmem:[%s7] sm:$0xf]
    %v321 = vld [vmem:[%s7 + $0x4] sm:$0xf]
    %v322 = vld [vmem:[%s7 + $0x8] sm:$0xf]
    %v323 = vld [vmem:[%s7 + $0xc] sm:$0xf]
    %v324 = vld [vmem:[%s8] sm:$0x1]
    %v326 = vlaneseq
    %v327 = vshrl.u32 %v326, 7
    %v328 = vsub.s32 0, %v327
    %v329 = vrot.slane %v324, %v328
    %v335 = vunpack.c.l.b16 %v320
    %v336 = vunpack.c.l.b16 %v321
    %v337 = vunpack.c.l.b16 %v322
    %v338 = vunpack.c.l.b16 %v323
    %v339 = vpack.c.b16 %v336, %v335
    %v340 = vpack.c.b16 %v338, %v337
    %v344 = vsel %vm269, %v319, 0
    %346 = vmatprep.subr.bf16.mxu0 0
    %347 = vmatpush1.bf16.msra.mxu0 %v339
    %348 = vmatprep.subr.bf16.mxu0 0
    %349 = vmatpush1.bf16.msra.mxu0 %v340
    %350 = vmatprep.subr.bf16.mxu0 0
    %351 = vmatpush1.bf16.msra.mxu0 0
    %352 = vmatprep.subr.bf16.mxu0 0
    %353 = vmatpush1.bf16.msra.mxu0 0
    %354 = vmatprep.subr.bf16.mxu0 0
    %355 = vmatpush1.bf16.msra.mxu0 0
    %356 = vmatprep.subr.bf16.mxu0 0
    %357 = vmatpush1.bf16.msra.mxu0 0
    %358 = vmatprep.subr.bf16.mxu0 0
    %359 = vmatpush1.bf16.msra.mxu0 0
    %360 = vmatprep.subr.bf16.mxu0 0
    %361 = vmatpush1.bf16.msra.mxu0 0
    %362 = vmatprep.subr.bf16.mxu0 0
    %363 = vmatpush1.bf16.msra.mxu0 0
    %364 = vmatprep.subr.bf16.mxu0 0
    %365 = vmatpush1.bf16.msra.mxu0 0
    %366 = vmatprep.subr.bf16.mxu0 0
    %367 = vmatpush1.bf16.msra.mxu0 0
    %368 = vmatprep.subr.bf16.mxu0 0
    %369 = vmatpush1.bf16.msra.mxu0 0
    %370 = vmatprep.subr.bf16.mxu0 0
    %371 = vmatpush1.bf16.msra.mxu0 0
    %372 = vmatprep.subr.bf16.mxu0 0
    %373 = vmatpush1.bf16.msra.mxu0 0
    %374 = vmatprep.subr.bf16.mxu0 0
    %375 = vmatpush1.bf16.msra.mxu0 0
    %376 = vmatprep.subr.bf16.mxu0 0
    %377 = vmatpush1.bf16.msra.mxu0 0
    %378 = vmatprep.mubr.bf16.mxu0 0
    %379 = vmatmul.mubr.bf16.gmra.mrb[0].mxu0 %v344
    %v380 = vpop.f32.mrb[0].mxu0
    %v381 = vadd.f32 %v329, %v380
    %v382 = vpop.f32.mrb[0].mxu0
    %v383 = vpop.f32.mrb[0].mxu0
    %v384 = vadd.f32 %v329, %v383
    %v385 = vpop.f32.mrb[0].mxu0
    %386 = vdwg.mxu0
    %v387 = vpack.c.bf16 %v384, %v381
    %v389 = vunpack.c.l.b16 %v387
    %v390 = vunpack.c.h.b16 %v387
    %v391 = vpack.c.b16 %v389, %v389
    %v392 = vpack.c.b16 %v390, %v390
    %vm395 = vcmask 125952
    %396 = vst.msk [vmem:[#allocation2] sm:$0xf] %vm395, %v391
    %397 = vst.msk [vmem:[#allocation2 + $0x4] sm:$0xf] %vm395, %v392
    // Predicated region
    $region38: #{tpu_custom_call.1} parent=1 // pred_check
      _
    $region39: #{tpu_custom_call.1} parent=1 // pred_check_branch
      %399 = sbr.rel (0) target = $region41
    $region40: #{tpu_custom_call.1} parent=1 // pred_region
      %s401 = ssub.s32 128, 128
      %402 = vsyncadd [#allocation3], %s401
      %s403 = sshll.u32 [#allocation2], 4
      %s404 = int_to_ptr.vmem [resolvable:$true] %s403
      %409 = dma.vmem_to_hbm [thread:$0]  %s404, 128, %s9, [#allocation3], 64, 64, 4
    $region41: #{tpu_custom_call.1} parent=1 // pred_fallthru
      _
    // Predicated region
    $region42: #{tpu_custom_call.1} parent=1 // pred_check
      _
    $region43: #{tpu_custom_call.1} parent=1 // pred_check_branch
      %411 = sbr.rel (0) target = $region45
    $region44: #{tpu_custom_call.1} parent=1 // pred_region
      %412 = dma.done [#allocation3], 128
    $region45: #{tpu_custom_call.1} parent=1 // pred_fallthru
      _
    %413 = vsyncpa [#allocation3], 1

</llo_original>
